<compile_context>
chip_gen: v7x
topology: tpu7x:2x2x1
jax: 0.10.0
libtpu: 0.0.40
codegen_flags: <defaults>
</compile_context>

<pallas_src>
import functools

import jax
import jax.numpy as jnp
from jax import lax
from jax.experimental import pallas as pl
from jax.experimental.pallas import tpu as pltpu


def _round_up(x, m):
    return ((x + m - 1) // m) * m


# ----------------------------------------------------------------------------
# Fast path: table resident in VMEM, gather with dynamic-sublane loads.
# ----------------------------------------------------------------------------
def _gather_vmem_kernel(idx_ref, tbl_ref, o_ref, *, rows_per_step):
    base = pl.program_id(0) * rows_per_step
    for c in range(rows_per_step // 8):
        rows = [
            tbl_ref[pl.ds(idx_ref[base + c * 8 + r], 1), :]
            for r in range(8)
        ]
        # One (8, d_pad) full-sublane, full-lane store per group (no masked vst).
        o_ref[pl.ds(c * 8, 8), :] = jnp.concatenate(rows, axis=0)


# ----------------------------------------------------------------------------
# Slow path: table stays in HBM; per-row DMAs land directly in the output tile.
# ----------------------------------------------------------------------------
def _gather_hbm_kernel(idx_ref, w_hbm, o_ref, sem, *, rows_per_step):
    base = pl.program_id(0) * rows_per_step
    copies = []
    for j in range(rows_per_step):
        row = idx_ref[base + j]
        cp = pltpu.make_async_copy(
            w_hbm.at[pl.ds(row, 1), :],    # (1, d_pad) window at a dynamic row
            o_ref.at[pl.ds(j, 1), :],      # lands straight in the output tile
            sem.at[0],
        )
        cp.start()
        copies.append(cp)
    for cp in copies:        # all copies share one DMA sem (equal sizes), each
        cp.wait()            # wait retires exactly one row's bytes


@functools.partial(
    jax.jit,
    static_argnames=("rows_per_step", "force_hbm_gather", "vmem_table_bytes_max"),
)
def _pallas_gather_padded(weight_padded, idx, *, rows_per_step, force_hbm_gather,
                          vmem_table_bytes_max):
    n, d_pad = weight_padded.shape
    b_pad = idx.shape[0]
    g = rows_per_step
    assert b_pad % g == 0
    itemsize = jnp.dtype(weight_padded.dtype).itemsize
    table_bytes = int(n) * int(d_pad) * itemsize
    use_vmem = (not force_hbm_gather) and table_bytes <= vmem_table_bytes_max

    if use_vmem:
        kernel = functools.partial(_gather_vmem_kernel, rows_per_step=g)
        grid_spec = pltpu.PrefetchScalarGridSpec(
            num_scalar_prefetch=1,
            grid=(b_pad // g,),
            # Block == full array dims (tile-legal for any n); constant block
            # index -> copied into VMEM once and resident for the whole grid.
            in_specs=[pl.BlockSpec((n, d_pad), lambda i, idx_ref: (0, 0))],
            out_specs=pl.BlockSpec((g, d_pad), lambda i, idx_ref: (i, 0)),
        )
        bytes_accessed = table_bytes + 2 * b_pad * d_pad * itemsize
    else:
        kernel = functools.partial(_gather_hbm_kernel, rows_per_step=g)
        grid_spec = pltpu.PrefetchScalarGridSpec(
            num_scalar_prefetch=1,
            grid=(b_pad // g,),
            in_specs=[pl.BlockSpec(memory_space=pl.ANY)],   # raw HBM ref
            out_specs=pl.BlockSpec((g, d_pad), lambda i, idx_ref: (i, 0)),
            scratch_shapes=[pltpu.SemaphoreType.DMA((1,))],
        )
        bytes_accessed = 2 * b_pad * d_pad * itemsize

    return pl.pallas_call(
        kernel,
        out_shape=jax.ShapeDtypeStruct((b_pad, d_pad), weight_padded.dtype),
        grid_spec=grid_spec,
        compiler_params=pltpu.CompilerParams(
            # Every step writes a disjoint output tile with no carried state.
            # TODO(synk): on v7x, pltpu.CORE_PARALLEL here shards grid steps
            # across both TensorCores; kept "parallel" for portability.
            dimension_semantics=("parallel",),
            vmem_limit_bytes=32 * 1024 * 1024,
        ),
        cost_estimate=pl.CostEstimate(
            flops=0, transcendentals=0,
            bytes_accessed=int(bytes_accessed) + 4 * int(b_pad)),
    )(idx, weight_padded)


def pallas_embedding_gather(weight_padded, indices, *, rows_per_step=64,
                            force_hbm_gather=False,
                            vmem_table_bytes_max=6 * 1024 * 1024,
                            max_rows_per_call=65536):
    """Gather rows `indices` from `weight_padded` ([N, d_pad], d_pad % 128 == 0).

    Returns a [len(indices), d_pad] array (caller slices the padded columns).
    """
    if rows_per_step % 8 != 0:
        raise ValueError("rows_per_step must be a multiple of 8")
    n, d_pad = weight_padded.shape
    indices = jnp.asarray(indices, dtype=jnp.int32)
    b = int(indices.shape[0])
    if b == 0:
        return jnp.zeros((0, d_pad), weight_padded.dtype)
    g = rows_per_step
    # Clamp in-range (the module allocates a dummy last row): VMEM/HBM refs have
    # no runtime bounds check, so the gather must never leave the table.
    # TODO(synk): torch.index_select raises on out-of-range indices; we clamp.
    idx = jnp.clip(indices, 0, n - 1)

    outs = []
    for lo in range(0, b, max_rows_per_call):   # keep the SMEM index array bounded
        chunk = idx[lo:lo + max_rows_per_call]
        cb = int(chunk.shape[0])
        # Bucket the padded length to a power of two (>= g): varying walk-batch
        # sizes reuse a handful of compiled kernels instead of one per length.
        cb_pad = _round_up(max(g, 1 << (cb - 1).bit_length()), g)
        chunk = jnp.pad(chunk, (0, cb_pad - cb), constant_values=n - 1)
        out = _pallas_gather_padded(
            weight_padded, chunk, rows_per_step=g,
            force_hbm_gather=force_hbm_gather,
            vmem_table_bytes_max=vmem_table_bytes_max)
        outs.append(out[:cb])
    return outs[0] if len(outs) == 1 else jnp.concatenate(outs, axis=0)


# ----------------------------------------------------------------------------
# Minimal MetaPath2Vec (forward-pass only) in JAX using the Pallas gather.
# ----------------------------------------------------------------------------
class MetaPath2VecJax:
    """Forward-pass-only JAX/Pallas port of MetaPath2Vec.

    Only forward(node_type, batch) -- an embedding row-gather -- is kernelised.
    """
    # TODO(synk): loader/_pos_sample/_neg_sample/loss/test are host-side random
    # walk sampling and training utilities; not ported to Pallas.

    def __init__(self, num_nodes_dict, embedding_dim, metapath, key):
        types = sorted(set(x[0] for x in metapath) | set(x[-1] for x in metapath))
        count = 0
        self.start, self.end = {}, {}
        for k in types:
            self.start[k] = count
            count += num_nodes_dict[k]
            self.end[k] = count
        self.dummy_idx = count
        self.embedding_dim = embedding_dim
        # Lane-dense storage: feature dim padded to a multiple of 128 so every
        # kernel access is full-lane; the logical weight is [:, :embedding_dim].
        self.d_pad = _round_up(embedding_dim, 128)
        # torch.nn.Embedding.reset_parameters() -> N(0, 1) init.
        self.weight_padded = jax.random.normal(
            key, (count + 1, self.d_pad), dtype=jnp.float32)

    @property
    def weight(self):
        # Logical embedding table, matching torch's [count + 1, embedding_dim].
        return self.weight_padded[:, : self.embedding_dim]

    def forward(self, node_type, batch=None, return_padded=False):
        s, e = self.start[node_type], self.end[node_type]
        if batch is None:
            # A node type's embeddings are a contiguous row range: plain slice.
            full = lax.slice(self.weight_padded, (s, 0), (e, self.d_pad))
            return full if return_padded else full[:, : self.embedding_dim]
        if e == s:
            raise ValueError(f"node type {node_type!r} has no nodes; cannot gather")
        batch = jnp.asarray(batch, dtype=jnp.int32)
        # Global row ids, clamped in-range (torch raises on OOB indices; we
        # clamp so the gather can never leave the table).
        global_idx = jnp.clip(batch, 0, e - s - 1) + s
        out = pallas_embedding_gather(self.weight_padded, global_idx)
        # return_padded=True lets downstream consumers skip the lane-padding
        # column slice (one extra full pass over the output at HBM bandwidth).
        return out if return_padded else out[:, : self.embedding_dim]


if __name__ == "__main__":
    key = jax.random.PRNGKey(0)
    k_w, k_b1, k_b2 = jax.random.split(key, 3)

    # Small heterogeneous graph: two node types, a cyclic metapath.
    num_nodes_dict = {"author": 20, "paper": 30}
    metapath = [("author", "writes", "paper"), ("paper", "written_by", "author")]
    embedding_dim = 32

    model = MetaPath2VecJax(num_nodes_dict, embedding_dim, metapath, k_w)

    # 1) Author batch (bucketed to one 64-row grid step) -- VMEM fast path.
    batch_a = jax.random.randint(k_b1, (10,), 0, num_nodes_dict["author"],
                                 dtype=jnp.int32)
    out_a = jax.block_until_ready(model.forward("author", batch_a))
    s, e = model.start["author"], model.end["author"]
    ref_a = model.weight[s:e][batch_a]
    assert out_a.shape == (10, embedding_dim)
    assert jnp.allclose(out_a, ref_a), "author gather mismatch vs reference"

    # 2) Larger paper batch (150 -> bucketed to 256 -> 4 grid steps).
    batch_p = jax.random.randint(k_b2, (150,), 0, num_nodes_dict["paper"],
                                 dtype=jnp.int32)
    out_p = jax.block_until_ready(model.forward("paper", batch_p))
    s, e = model.start["paper"], model.end["paper"]
    ref_p = model.weight[s:e][batch_p]
    assert out_p.shape == (150, embedding_dim)
    assert jnp.allclose(out_p, ref_p), "paper gather mismatch vs reference"

    # 3) Same gather forced through the HBM DMA-gather path (big-table path).
    global_idx = batch_p + model.start["paper"]
    out_hbm = jax.block_until_ready(
        pallas_embedding_gather(model.weight_padded, global_idx,
                                force_hbm_gather=True))
    assert jnp.allclose(out_hbm[:, :embedding_dim], ref_p), "HBM gather mismatch"

    # 4) batch=None path: contiguous slice, no kernel launch.
    out_all = jax.block_until_ready(model.forward("paper"))
    ref_all = model.weight[model.start["paper"]:model.end["paper"]]
    assert out_all.shape == (num_nodes_dict["paper"], embedding_dim)
    assert jnp.allclose(out_all, ref_all)

    print("KERNEL_OK")
</pallas_src>

<mosaic_0001>
module attributes {stable_mosaic.version = 11 : i64} {
  func.func @_gather_vmem_kernel(%arg0: i32, %arg1: memref<64xi32, #tpu.memory_space<smem>>, %arg2: memref<51x128xf32, #tpu.memory_space<vmem>>, %arg3: memref<64x128xf32, #tpu.memory_space<vmem>>) attributes {dimension_semantics = [#tpu.dimension_semantics<parallel>], iteration_bounds = array<i64: 1>, scalar_prefetch = 1 : i64, scratch_operands = 0 : i64, tpu.core_type = #tpu.core_type<tc>, window_params = [{pipeline_mode = #tpu.pipeline_mode<synchronous>, transform_indices = @transform_0, window_bounds = array<i64: 51, 128>}, {transform_indices = @transform_1, window_bounds = array<i64: 64, 128>}]} {
    %c64_i32 = arith.constant 64 : i32
    %0 = arith.muli %arg0, %c64_i32 : i32
    %c0_i32 = arith.constant 0 : i32
    %1 = arith.addi %0, %c0_i32 : i32
    %c0_i32_0 = arith.constant 0 : i32
    %2 = arith.addi %1, %c0_i32_0 : i32
    %3 = arith.index_cast %2 : i32 to index
    %4 = memref.load %arg1[%3] : memref<64xi32, #tpu.memory_space<smem>>
    %5 = arith.index_cast %4 : i32 to index
    %c0 = arith.constant 0 : index
    %6 = vector.load %arg2[%5, %c0] : memref<51x128xf32, #tpu.memory_space<vmem>>, vector<1x128xf32>
    %c0_i32_1 = arith.constant 0 : i32
    %7 = arith.addi %0, %c0_i32_1 : i32
    %c1_i32 = arith.constant 1 : i32
    %8 = arith.addi %7, %c1_i32 : i32
    %9 = arith.index_cast %8 : i32 to index
    %10 = memref.load %arg1[%9] : memref<64xi32, #tpu.memory_space<smem>>
    %11 = arith.index_cast %10 : i32 to index
    %c0_2 = arith.constant 0 : index
    %12 = vector.load %arg2[%11, %c0_2] : memref<51x128xf32, #tpu.memory_space<vmem>>, vector<1x128xf32>
    %c0_i32_3 = arith.constant 0 : i32
    %13 = arith.addi %0, %c0_i32_3 : i32
    %c2_i32 = arith.constant 2 : i32
    %14 = arith.addi %13, %c2_i32 : i32
    %15 = arith.index_cast %14 : i32 to index
    %16 = memref.load %arg1[%15] : memref<64xi32, #tpu.memory_space<smem>>
    %17 = arith.index_cast %16 : i32 to index
    %c0_4 = arith.constant 0 : index
    %18 = vector.load %arg2[%17, %c0_4] : memref<51x128xf32, #tpu.memory_space<vmem>>, vector<1x128xf32>
    %c0_i32_5 = arith.constant 0 : i32
    %19 = arith.addi %0, %c0_i32_5 : i32
    %c3_i32 = arith.constant 3 : i32
    %20 = arith.addi %19, %c3_i32 : i32
    %21 = arith.index_cast %20 : i32 to index
    %22 = memref.load %arg1[%21] : memref<64xi32, #tpu.memory_space<smem>>
    %23 = arith.index_cast %22 : i32 to index
    %c0_6 = arith.constant 0 : index
    %24 = vector.load %arg2[%23, %c0_6] : memref<51x128xf32, #tpu.memory_space<vmem>>, vector<1x128xf32>
    %c0_i32_7 = arith.constant 0 : i32
    %25 = arith.addi %0, %c0_i32_7 : i32
    %c4_i32 = arith.constant 4 : i32
    %26 = arith.addi %25, %c4_i32 : i32
    %27 = arith.index_cast %26 : i32 to index
    %28 = memref.load %arg1[%27] : memref<64xi32, #tpu.memory_space<smem>>
    %29 = arith.index_cast %28 : i32 to index
    %c0_8 = arith.constant 0 : index
    %30 = vector.load %arg2[%29, %c0_8] : memref<51x128xf32, #tpu.memory_space<vmem>>, vector<1x128xf32>
    %c0_i32_9 = arith.constant 0 : i32
    %31 = arith.addi %0, %c0_i32_9 : i32
    %c5_i32 = arith.constant 5 : i32
    %32 = arith.addi %31, %c5_i32 : i32
    %33 = arith.index_cast %32 : i32 to index
    %34 = memref.load %arg1[%33] : memref<64xi32, #tpu.memory_space<smem>>
    %35 = arith.index_cast %34 : i32 to index
    %c0_10 = arith.constant 0 : index
    %36 = vector.load %arg2[%35, %c0_10] : memref<51x128xf32, #tpu.memory_space<vmem>>, vector<1x128xf32>
    %c0_i32_11 = arith.constant 0 : i32
    %37 = arith.addi %0, %c0_i32_11 : i32
    %c6_i32 = arith.constant 6 : i32
    %38 = arith.addi %37, %c6_i32 : i32
    %39 = arith.index_cast %38 : i32 to index
    %40 = memref.load %arg1[%39] : memref<64xi32, #tpu.memory_space<smem>>
    %41 = arith.index_cast %40 : i32 to index
    %c0_12 = arith.constant 0 : index
    %42 = vector.load %arg2[%41, %c0_12] : memref<51x128xf32, #tpu.memory_space<vmem>>, vector<1x128xf32>
    %c0_i32_13 = arith.constant 0 : i32
    %43 = arith.addi %0, %c0_i32_13 : i32
    %c7_i32 = arith.constant 7 : i32
    %44 = arith.addi %43, %c7_i32 : i32
    %45 = arith.index_cast %44 : i32 to index
    %46 = memref.load %arg1[%45] : memref<64xi32, #tpu.memory_space<smem>>
    %47 = arith.index_cast %46 : i32 to index
    %c0_14 = arith.constant 0 : index
    %48 = vector.load %arg2[%47, %c0_14] : memref<51x128xf32, #tpu.memory_space<vmem>>, vector<1x128xf32>
    %49 = tpu.concatenate %6, %12, %18, %24, %30, %36, %42, %48 in 0 : vector<1x128xf32>, vector<1x128xf32>, vector<1x128xf32>, vector<1x128xf32>, vector<1x128xf32>, vector<1x128xf32>, vector<1x128xf32>, vector<1x128xf32> -> vector<8x128xf32>
    %c0_15 = arith.constant 0 : index
    %c0_16 = arith.constant 0 : index
    %50 = vector.load %arg3[%c0_15, %c0_16] : memref<64x128xf32, #tpu.memory_space<vmem>>, vector<8x128xf32>
    tpu.vector_store %arg3[%c0_15, %c0_16], %49 {strides = array<i32>} : memref<64x128xf32, #tpu.memory_space<vmem>>, vector<8x128xf32>,
    %c8_i32 = arith.constant 8 : i32
    %51 = arith.addi %0, %c8_i32 : i32
    %c0_i32_17 = arith.constant 0 : i32
    %52 = arith.addi %51, %c0_i32_17 : i32
    %53 = arith.index_cast %52 : i32 to index
    %54 = memref.load %arg1[%53] : memref<64xi32, #tpu.memory_space<smem>>
    %55 = arith.index_cast %54 : i32 to index
    %c0_18 = arith.constant 0 : index
    %56 = vector.load %arg2[%55, %c0_18] : memref<51x128xf32, #tpu.memory_space<vmem>>, vector<1x128xf32>
    %c8_i32_19 = arith.constant 8 : i32
    %57 = arith.addi %0, %c8_i32_19 : i32
    %c1_i32_20 = arith.constant 1 : i32
    %58 = arith.addi %57, %c1_i32_20 : i32
    %59 = arith.index_cast %58 : i32 to index
    %60 = memref.load %arg1[%59] : memref<64xi32, #tpu.memory_space<smem>>
    %61 = arith.index_cast %60 : i32 to index
    %c0_21 = arith.constant 0 : index
    %62 = vector.load %arg2[%61, %c0_21] : memref<51x128xf32, #tpu.memory_space<vmem>>, vector<1x128xf32>
    %c8_i32_22 = arith.constant 8 : i32
    %63 = arith.addi %0, %c8_i32_22 : i32
    %c2_i32_23 = arith.constant 2 : i32
    %64 = arith.addi %63, %c2_i32_23 : i32
    %65 = arith.index_cast %64 : i32 to index
    %66 = memref.load %arg1[%65] : memref<64xi32, #tpu.memory_space<smem>>
    %67 = arith.index_cast %66 : i32 to index
    %c0_24 = arith.constant 0 : index
    %68 = vector.load %arg2[%67, %c0_24] : memref<51x128xf32, #tpu.memory_space<vmem>>, vector<1x128xf32>
    %c8_i32_25 = arith.constant 8 : i32
    %69 = arith.addi %0, %c8_i32_25 : i32
    %c3_i32_26 = arith.constant 3 : i32
    %70 = arith.addi %69, %c3_i32_26 : i32
    %71 = arith.index_cast %70 : i32 to index
    %72 = memref.load %arg1[%71] : memref<64xi32, #tpu.memory_space<smem>>
    %73 = arith.index_cast %72 : i32 to index
    %c0_27 = arith.constant 0 : index
    %74 = vector.load %arg2[%73, %c0_27] : memref<51x128xf32, #tpu.memory_space<vmem>>, vector<1x128xf32>
    %c8_i32_28 = arith.constant 8 : i32
    %75 = arith.addi %0, %c8_i32_28 : i32
    %c4_i32_29 = arith.constant 4 : i32
    %76 = arith.addi %75, %c4_i32_29 : i32
    %77 = arith.index_cast %76 : i32 to index
    %78 = memref.load %arg1[%77] : memref<64xi32, #tpu.memory_space<smem>>
    %79 = arith.index_cast %78 : i32 to index
    %c0_30 = arith.constant 0 : index
    %80 = vector.load %arg2[%79, %c0_30] : memref<51x128xf32, #tpu.memory_space<vmem>>, vector<1x128xf32>
    %c8_i32_31 = arith.constant 8 : i32
    %81 = arith.addi %0, %c8_i32_31 : i32
    %c5_i32_32 = arith.constant 5 : i32
    %82 = arith.addi %81, %c5_i32_32 : i32
    %83 = arith.index_cast %82 : i32 to index
    %84 = memref.load %arg1[%83] : memref<64xi32, #tpu.memory_space<smem>>
    %85 = arith.index_cast %84 : i32 to index
    %c0_33 = arith.constant 0 : index
    %86 = vector.load %arg2[%85, %c0_33] : memref<51x128xf32, #tpu.memory_space<vmem>>, vector<1x128xf32>
    %c8_i32_34 = arith.constant 8 : i32
    %87 = arith.addi %0, %c8_i32_34 : i32
    %c6_i32_35 = arith.constant 6 : i32
    %88 = arith.addi %87, %c6_i32_35 : i32
    %89 = arith.index_cast %88 : i32 to index
    %90 = memref.load %arg1[%89] : memref<64xi32, #tpu.memory_space<smem>>
    %91 = arith.index_cast %90 : i32 to index
    %c0_36 = arith.constant 0 : index
    %92 = vector.load %arg2[%91, %c0_36] : memref<51x128xf32, #tpu.memory_space<vmem>>, vector<1x128xf32>
    %c8_i32_37 = arith.constant 8 : i32
    %93 = arith.addi %0, %c8_i32_37 : i32
    %c7_i32_38 = arith.constant 7 : i32
    %94 = arith.addi %93, %c7_i32_38 : i32
    %95 = arith.index_cast %94 : i32 to index
    %96 = memref.load %arg1[%95] : memref<64xi32, #tpu.memory_space<smem>>
    %97 = arith.index_cast %96 : i32 to index
    %c0_39 = arith.constant 0 : index
    %98 = vector.load %arg2[%97, %c0_39] : memref<51x128xf32, #tpu.memory_space<vmem>>, vector<1x128xf32>
    %99 = tpu.concatenate %56, %62, %68, %74, %80, %86, %92, %98 in 0 : vector<1x128xf32>, vector<1x128xf32>, vector<1x128xf32>, vector<1x128xf32>, vector<1x128xf32>, vector<1x128xf32>, vector<1x128xf32>, vector<1x128xf32> -> vector<8x128xf32>
    %c8 = arith.constant 8 : index
    %c0_40 = arith.constant 0 : index
    %100 = vector.load %arg3[%c8, %c0_40] : memref<64x128xf32, #tpu.memory_space<vmem>>, vector<8x128xf32>
    tpu.vector_store %arg3[%c8, %c0_40], %99 {strides = array<i32>} : memref<64x128xf32, #tpu.memory_space<vmem>>, vector<8x128xf32>,
    %c16_i32 = arith.constant 16 : i32
    %101 = arith.addi %0, %c16_i32 : i32
    %c0_i32_41 = arith.constant 0 : i32
    %102 = arith.addi %101, %c0_i32_41 : i32
    %103 = arith.index_cast %102 : i32 to index
    %104 = memref.load %arg1[%103] : memref<64xi32, #tpu.memory_space<smem>>
    %105 = arith.index_cast %104 : i32 to index
    %c0_42 = arith.constant 0 : index
    %106 = vector.load %arg2[%105, %c0_42] : memref<51x128xf32, #tpu.memory_space<vmem>>, vector<1x128xf32>
    %c16_i32_43 = arith.constant 16 : i32
    %107 = arith.addi %0, %c16_i32_43 : i32
    %c1_i32_44 = arith.constant 1 : i32
    %108 = arith.addi %107, %c1_i32_44 : i32
    %109 = arith.index_cast %108 : i32 to index
    %110 = memref.load %arg1[%109] : memref<64xi32, #tpu.memory_space<smem>>
    %111 = arith.index_cast %110 : i32 to index
    %c0_45 = arith.constant 0 : index
    %112 = vector.load %arg2[%111, %c0_45] : memref<51x128xf32, #tpu.memory_space<vmem>>, vector<1x128xf32>
    %c16_i32_46 = arith.constant 16 : i32
    %113 = arith.addi %0, %c16_i32_46 : i32
    %c2_i32_47 = arith.constant 2 : i32
    %114 = arith.addi %113, %c2_i32_47 : i32
    %115 = arith.index_cast %114 : i32 to index
    %116 = memref.load %arg1[%115] : memref<64xi32, #tpu.memory_space<smem>>
    %117 = arith.index_cast %116 : i32 to index
    %c0_48 = arith.constant 0 : index
    %118 = vector.load %arg2[%117, %c0_48] : memref<51x128xf32, #tpu.memory_space<vmem>>, vector<1x128xf32>
    %c16_i32_49 = arith.constant 16 : i32
    %119 = arith.addi %0, %c16_i32_49 : i32
    %c3_i32_50 = arith.constant 3 : i32
    %120 = arith.addi %119, %c3_i32_50 : i32
    %121 = arith.index_cast %120 : i32 to index
    %122 = memref.load %arg1[%121] : memref<64xi32, #tpu.memory_space<smem>>
    %123 = arith.index_cast %122 : i32 to index
    %c0_51 = arith.constant 0 : index
    %124 = vector.load %arg2[%123, %c0_51] : memref<51x128xf32, #tpu.memory_space<vmem>>, vector<1x128xf32>
    %c16_i32_52 = arith.constant 16 : i32
    %125 = arith.addi %0, %c16_i32_52 : i32
    %c4_i32_53 = arith.constant 4 : i32
    %126 = arith.addi %125, %c4_i32_53 : i32
    %127 = arith.index_cast %126 : i32 to index
    %128 = memref.load %arg1[%127] : memref<64xi32, #tpu.memory_space<smem>>
    %129 = arith.index_cast %128 : i32 to index
    %c0_54 = arith.constant 0 : index
    %130 = vector.load %arg2[%129, %c0_54] : memref<51x128xf32, #tpu.memory_space<vmem>>, vector<1x128xf32>
    %c16_i32_55 = arith.constant 16 : i32
    %131 = arith.addi %0, %c16_i32_55 : i32
    %c5_i32_56 = arith.constant 5 : i32
    %132 = arith.addi %131, %c5_i32_56 : i32
    %133 = arith.index_cast %132 : i32 to index
    %134 = memref.load %arg1[%133] : memref<64xi32, #tpu.memory_space<smem>>
    %135 = arith.index_cast %134 : i32 to index
    %c0_57 = arith.constant 0 : index
    %136 = vector.load %arg2[%135, %c0_57] : memref<51x128xf32, #tpu.memory_space<vmem>>, vector<1x128xf32>
    %c16_i32_58 = arith.constant 16 : i32
    %137 = arith.addi %0, %c16_i32_58 : i32
    %c6_i32_59 = arith.constant 6 : i32
    %138 = arith.addi %137, %c6_i32_59 : i32
    %139 = arith.index_cast %138 : i32 to index
    %140 = memref.load %arg1[%139] : memref<64xi32, #tpu.memory_space<smem>>
    %141 = arith.index_cast %140 : i32 to index
    %c0_60 = arith.constant 0 : index
    %142 = vector.load %arg2[%141, %c0_60] : memref<51x128xf32, #tpu.memory_space<vmem>>, vector<1x128xf32>
    %c16_i32_61 = arith.constant 16 : i32
    %143 = arith.addi %0, %c16_i32_61 : i32
    %c7_i32_62 = arith.constant 7 : i32
    %144 = arith.addi %143, %c7_i32_62 : i32
    %145 = arith.index_cast %144 : i32 to index
    %146 = memref.load %arg1[%145] : memref<64xi32, #tpu.memory_space<smem>>
    %147 = arith.index_cast %146 : i32 to index
    %c0_63 = arith.constant 0 : index
    %148 = vector.load %arg2[%147, %c0_63] : memref<51x128xf32, #tpu.memory_space<vmem>>, vector<1x128xf32>
    %149 = tpu.concatenate %106, %112, %118, %124, %130, %136, %142, %148 in 0 : vector<1x128xf32>, vector<1x128xf32>, vector<1x128xf32>, vector<1x128xf32>, vector<1x128xf32>, vector<1x128xf32>, vector<1x128xf32>, vector<1x128xf32> -> vector<8x128xf32>
    %c16 = arith.constant 16 : index
    %c0_64 = arith.constant 0 : index
    %150 = vector.load %arg3[%c16, %c0_64] : memref<64x128xf32, #tpu.memory_space<vmem>>, vector<8x128xf32>
    tpu.vector_store %arg3[%c16, %c0_64], %149 {strides = array<i32>} : memref<64x128xf32, #tpu.memory_space<vmem>>, vector<8x128xf32>,
    %c24_i32 = arith.constant 24 : i32
    %151 = arith.addi %0, %c24_i32 : i32
    %c0_i32_65 = arith.constant 0 : i32
    %152 = arith.addi %151, %c0_i32_65 : i32
    %153 = arith.index_cast %152 : i32 to index
    %154 = memref.load %arg1[%153] : memref<64xi32, #tpu.memory_space<smem>>
    %155 = arith.index_cast %154 : i32 to index
    %c0_66 = arith.constant 0 : index
    %156 = vector.load %arg2[%155, %c0_66] : memref<51x128xf32, #tpu.memory_space<vmem>>, vector<1x128xf32>
    %c24_i32_67 = arith.constant 24 : i32
    %157 = arith.addi %0, %c24_i32_67 : i32
    %c1_i32_68 = arith.constant 1 : i32
    %158 = arith.addi %157, %c1_i32_68 : i32
    %159 = arith.index_cast %158 : i32 to index
    %160 = memref.load %arg1[%159] : memref<64xi32, #tpu.memory_space<smem>>
    %161 = arith.index_cast %160 : i32 to index
    %c0_69 = arith.constant 0 : index
    %162 = vector.load %arg2[%161, %c0_69] : memref<51x128xf32, #tpu.memory_space<vmem>>, vector<1x128xf32>
    %c24_i32_70 = arith.constant 24 : i32
    %163 = arith.addi %0, %c24_i32_70 : i32
    %c2_i32_71 = arith.constant 2 : i32
    %164 = arith.addi %163, %c2_i32_71 : i32
    %165 = arith.index_cast %164 : i32 to index
    %166 = memref.load %arg1[%165] : memref<64xi32, #tpu.memory_space<smem>>
    %167 = arith.index_cast %166 : i32 to index
    %c0_72 = arith.constant 0 : index
    %168 = vector.load %arg2[%167, %c0_72] : memref<51x128xf32, #tpu.memory_space<vmem>>, vector<1x128xf32>
    %c24_i32_73 = arith.constant 24 : i32
    %169 = arith.addi %0, %c24_i32_73 : i32
    %c3_i32_74 = arith.constant 3 : i32
    %170 = arith.addi %169, %c3_i32_74 : i32
    %171 = arith.index_cast %170 : i32 to index
    %172 = memref.load %arg1[%171] : memref<64xi32, #tpu.memory_space<smem>>
    %173 = arith.index_cast %172 : i32 to index
    %c0_75 = arith.constant 0 : index
    %174 = vector.load %arg2[%173, %c0_75] : memref<51x128xf32, #tpu.memory_space<vmem>>, vector<1x128xf32>
    %c24_i32_76 = arith.constant 24 : i32
    %175 = arith.addi %0, %c24_i32_76 : i32
    %c4_i32_77 = arith.constant 4 : i32
    %176 = arith.addi %175, %c4_i32_77 : i32
    %177 = arith.index_cast %176 : i32 to index
    %178 = memref.load %arg1[%177] : memref<64xi32, #tpu.memory_space<smem>>
    %179 = arith.index_cast %178 : i32 to index
    %c0_78 = arith.constant 0 : index
    %180 = vector.load %arg2[%179, %c0_78] : memref<51x128xf32, #tpu.memory_space<vmem>>, vector<1x128xf32>
    %c24_i32_79 = arith.constant 24 : i32
    %181 = arith.addi %0, %c24_i32_79 : i32
    %c5_i32_80 = arith.constant 5 : i32
    %182 = arith.addi %181, %c5_i32_80 : i32
    %183 = arith.index_cast %182 : i32 to index
    %184 = memref.load %arg1[%183] : memref<64xi32, #tpu.memory_space<smem>>
    %185 = arith.index_cast %184 : i32 to index
    %c0_81 = arith.constant 0 : index
    %186 = vector.load %arg2[%185, %c0_81] : memref<51x128xf32, #tpu.memory_space<vmem>>, vector<1x128xf32>
    %c24_i32_82 = arith.constant 24 : i32
    %187 = arith.addi %0, %c24_i32_82 : i32
    %c6_i32_83 = arith.constant 6 : i32
    %188 = arith.addi %187, %c6_i32_83 : i32
    %189 = arith.index_cast %188 : i32 to index
    %190 = memref.load %arg1[%189] : memref<64xi32, #tpu.memory_space<smem>>
    %191 = arith.index_cast %190 : i32 to index
    %c0_84 = arith.constant 0 : index
    %192 = vector.load %arg2[%191, %c0_84] : memref<51x128xf32, #tpu.memory_space<vmem>>, vector<1x128xf32>
    %c24_i32_85 = arith.constant 24 : i32
    %193 = arith.addi %0, %c24_i32_85 : i32
    %c7_i32_86 = arith.constant 7 : i32
    %194 = arith.addi %193, %c7_i32_86 : i32
    %195 = arith.index_cast %194 : i32 to index
    %196 = memref.load %arg1[%195] : memref<64xi32, #tpu.memory_space<smem>>
    %197 = arith.index_cast %196 : i32 to index
    %c0_87 = arith.constant 0 : index
    %198 = vector.load %arg2[%197, %c0_87] : memref<51x128xf32, #tpu.memory_space<vmem>>, vector<1x128xf32>
    %199 = tpu.concatenate %156, %162, %168, %174, %180, %186, %192, %198 in 0 : vector<1x128xf32>, vector<1x128xf32>, vector<1x128xf32>, vector<1x128xf32>, vector<1x128xf32>, vector<1x128xf32>, vector<1x128xf32>, vector<1x128xf32> -> vector<8x128xf32>
    %c24 = arith.constant 24 : index
    %c0_88 = arith.constant 0 : index
    %200 = vector.load %arg3[%c24, %c0_88] : memref<64x128xf32, #tpu.memory_space<vmem>>, vector<8x128xf32>
    tpu.vector_store %arg3[%c24, %c0_88], %199 {strides = array<i32>} : memref<64x128xf32, #tpu.memory_space<vmem>>, vector<8x128xf32>,
    %c32_i32 = arith.constant 32 : i32
    %201 = arith.addi %0, %c32_i32 : i32
    %c0_i32_89 = arith.constant 0 : i32
    %202 = arith.addi %201, %c0_i32_89 : i32
    %203 = arith.index_cast %202 : i32 to index
    %204 = memref.load %arg1[%203] : memref<64xi32, #tpu.memory_space<smem>>
    %205 = arith.index_cast %204 : i32 to index
    %c0_90 = arith.constant 0 : index
    %206 = vector.load %arg2[%205, %c0_90] : memref<51x128xf32, #tpu.memory_space<vmem>>, vector<1x128xf32>
    %c32_i32_91 = arith.constant 32 : i32
    %207 = arith.addi %0, %c32_i32_91 : i32
    %c1_i32_92 = arith.constant 1 : i32
    %208 = arith.addi %207, %c1_i32_92 : i32
    %209 = arith.index_cast %208 : i32 to index
    %210 = memref.load %arg1[%209] : memref<64xi32, #tpu.memory_space<smem>>
    %211 = arith.index_cast %210 : i32 to index
    %c0_93 = arith.constant 0 : index
    %212 = vector.load %arg2[%211, %c0_93] : memref<51x128xf32, #tpu.memory_space<vmem>>, vector<1x128xf32>
    %c32_i32_94 = arith.constant 32 : i32
    %213 = arith.addi %0, %c32_i32_94 : i32
    %c2_i32_95 = arith.constant 2 : i32
    %214 = arith.addi %213, %c2_i32_95 : i32
    %215 = arith.index_cast %214 : i32 to index
    %216 = memref.load %arg1[%215] : memref<64xi32, #tpu.memory_space<smem>>
    %217 = arith.index_cast %216 : i32 to index
    %c0_96 = arith.constant 0 : index
    %218 = vector.load %arg2[%217, %c0_96] : memref<51x128xf32, #tpu.memory_space<vmem>>, vector<1x128xf32>
    %c32_i32_97 = arith.constant 32 : i32
    %219 = arith.addi %0, %c32_i32_97 : i32
    %c3_i32_98 = arith.constant 3 : i32
    %220 = arith.addi %219, %c3_i32_98 : i32
    %221 = arith.index_cast %220 : i32 to index
    %222 = memref.load %arg1[%221] : memref<64xi32, #tpu.memory_space<smem>>
    %223 = arith.index_cast %222 : i32 to index
    %c0_99 = arith.constant 0 : index
    %224 = vector.load %arg2[%223, %c0_99] : memref<51x128xf32, #tpu.memory_space<vmem>>, vector<1x128xf32>
    %c32_i32_100 = arith.constant 32 : i32
    %225 = arith.addi %0, %c32_i32_100 : i32
    %c4_i32_101 = arith.constant 4 : i32
    %226 = arith.addi %225, %c4_i32_101 : i32
    %227 = arith.index_cast %226 : i32 to index
    %228 = memref.load %arg1[%227] : memref<64xi32, #tpu.memory_space<smem>>
    %229 = arith.index_cast %228 : i32 to index
    %c0_102 = arith.constant 0 : index
    %230 = vector.load %arg2[%229, %c0_102] : memref<51x128xf32, #tpu.memory_space<vmem>>, vector<1x128xf32>
    %c32_i32_103 = arith.constant 32 : i32
    %231 = arith.addi %0, %c32_i32_103 : i32
    %c5_i32_104 = arith.constant 5 : i32
    %232 = arith.addi %231, %c5_i32_104 : i32
    %233 = arith.index_cast %232 : i32 to index
    %234 = memref.load %arg1[%233] : memref<64xi32, #tpu.memory_space<smem>>
    %235 = arith.index_cast %234 : i32 to index
    %c0_105 = arith.constant 0 : index
    %236 = vector.load %arg2[%235, %c0_105] : memref<51x128xf32, #tpu.memory_space<vmem>>, vector<1x128xf32>
    %c32_i32_106 = arith.constant 32 : i32
    %237 = arith.addi %0, %c32_i32_106 : i32
    %c6_i32_107 = arith.constant 6 : i32
    %238 = arith.addi %237, %c6_i32_107 : i32
    %239 = arith.index_cast %238 : i32 to index
    %240 = memref.load %arg1[%239] : memref<64xi32, #tpu.memory_space<smem>>
    %241 = arith.index_cast %240 : i32 to index
    %c0_108 = arith.constant 0 : index
    %242 = vector.load %arg2[%241, %c0_108] : memref<51x128xf32, #tpu.memory_space<vmem>>, vector<1x128xf32>
    %c32_i32_109 = arith.constant 32 : i32
    %243 = arith.addi %0, %c32_i32_109 : i32
    %c7_i32_110 = arith.constant 7 : i32
    %244 = arith.addi %243, %c7_i32_110 : i32
    %245 = arith.index_cast %244 : i32 to index
    %246 = memref.load %arg1[%245] : memref<64xi32, #tpu.memory_space<smem>>
    %247 = arith.index_cast %246 : i32 to index
    %c0_111 = arith.constant 0 : index
    %248 = vector.load %arg2[%247, %c0_111] : memref<51x128xf32, #tpu.memory_space<vmem>>, vector<1x128xf32>
    %249 = tpu.concatenate %206, %212, %218, %224, %230, %236, %242, %248 in 0 : vector<1x128xf32>, vector<1x128xf32>, vector<1x128xf32>, vector<1x128xf32>, vector<1x128xf32>, vector<1x128xf32>, vector<1x128xf32>, vector<1x128xf32> -> vector<8x128xf32>
    %c32 = arith.constant 32 : index
    %c0_112 = arith.constant 0 : index
    %250 = vector.load %arg3[%c32, %c0_112] : memref<64x128xf32, #tpu.memory_space<vmem>>, vector<8x128xf32>
    tpu.vector_store %arg3[%c32, %c0_112], %249 {strides = array<i32>} : memref<64x128xf32, #tpu.memory_space<vmem>>, vector<8x128xf32>,
    %c40_i32 = arith.constant 40 : i32
    %251 = arith.addi %0, %c40_i32 : i32
    %c0_i32_113 = arith.constant 0 : i32
    %252 = arith.addi %251, %c0_i32_113 : i32
    %253 = arith.index_cast %252 : i32 to index
    %254 = memref.load %arg1[%253] : memref<64xi32, #tpu.memory_space<smem>>
    %255 = arith.index_cast %254 : i32 to index
    %c0_114 = arith.constant 0 : index
    %256 = vector.load %arg2[%255, %c0_114] : memref<51x128xf32, #tpu.memory_space<vmem>>, vector<1x128xf32>
    %c40_i32_115 = arith.constant 40 : i32
    %257 = arith.addi %0, %c40_i32_115 : i32
    %c1_i32_116 = arith.constant 1 : i32
    %258 = arith.addi %257, %c1_i32_116 : i32
    %259 = arith.index_cast %258 : i32 to index
    %260 = memref.load %arg1[%259] : memref<64xi32, #tpu.memory_space<smem>>
    %261 = arith.index_cast %260 : i32 to index
    %c0_117 = arith.constant 0 : index
    %262 = vector.load %arg2[%261, %c0_117] : memref<51x128xf32, #tpu.memory_space<vmem>>, vector<1x128xf32>
    %c40_i32_118 = arith.constant 40 : i32
    %263 = arith.addi %0, %c40_i32_118 : i32
    %c2_i32_119 = arith.constant 2 : i32
    %264 = arith.addi %263, %c2_i32_119 : i32
    %265 = arith.index_cast %264 : i32 to index
    %266 = memref.load %arg1[%265] : memref<64xi32, #tpu.memory_space<smem>>
    %267 = arith.index_cast %266 : i32 to index
    %c0_120 = arith.constant 0 : index
    %268 = vector.load %arg2[%267, %c0_120] : memref<51x128xf32, #tpu.memory_space<vmem>>, vector<1x128xf32>
    %c40_i32_121 = arith.constant 40 : i32
    %269 = arith.addi %0, %c40_i32_121 : i32
    %c3_i32_122 = arith.constant 3 : i32
    %270 = arith.addi %269, %c3_i32_122 : i32
    %271 = arith.index_cast %270 : i32 to index
    %272 = memref.load %arg1[%271] : memref<64xi32, #tpu.memory_space<smem>>
    %273 = arith.index_cast %272 : i32 to index
    %c0_123 = arith.constant 0 : index
    %274 = vector.load %arg2[%273, %c0_123] : memref<51x128xf32, #tpu.memory_space<vmem>>, vector<1x128xf32>
    %c40_i32_124 = arith.constant 40 : i32
    %275 = arith.addi %0, %c40_i32_124 : i32
    %c4_i32_125 = arith.constant 4 : i32
    %276 = arith.addi %275, %c4_i32_125 : i32
    %277 = arith.index_cast %276 : i32 to index
    %278 = memref.load %arg1[%277] : memref<64xi32, #tpu.memory_space<smem>>
    %279 = arith.index_cast %278 : i32 to index
    %c0_126 = arith.constant 0 : index
    %280 = vector.load %arg2[%279, %c0_126] : memref<51x128xf32, #tpu.memory_space<vmem>>, vector<1x128xf32>
    %c40_i32_127 = arith.constant 40 : i32
    %281 = arith.addi %0, %c40_i32_127 : i32
    %c5_i32_128 = arith.constant 5 : i32
    %282 = arith.addi %281, %c5_i32_128 : i32
    %283 = arith.index_cast %282 : i32 to index
    %284 = memref.load %arg1[%283] : memref<64xi32, #tpu.memory_space<smem>>
    %285 = arith.index_cast %284 : i32 to index
    %c0_129 = arith.constant 0 : index
    %286 = vector.load %arg2[%285, %c0_129] : memref<51x128xf32, #tpu.memory_space<vmem>>, vector<1x128xf32>
    %c40_i32_130 = arith.constant 40 : i32
    %287 = arith.addi %0, %c40_i32_130 : i32
    %c6_i32_131 = arith.constant 6 : i32
    %288 = arith.addi %287, %c6_i32_131 : i32
    %289 = arith.index_cast %288 : i32 to index
    %290 = memref.load %arg1[%289] : memref<64xi32, #tpu.memory_space<smem>>
    %291 = arith.index_cast %290 : i32 to index
    %c0_132 = arith.constant 0 : index
    %292 = vector.load %arg2[%291, %c0_132] : memref<51x128xf32, #tpu.memory_space<vmem>>, vector<1x128xf32>
    %c40_i32_133 = arith.constant 40 : i32
    %293 = arith.addi %0, %c40_i32_133 : i32
    %c7_i32_134 = arith.constant 7 : i32
    %294 = arith.addi %293, %c7_i32_134 : i32
    %295 = arith.index_cast %294 : i32 to index
    %296 = memref.load %arg1[%295] : memref<64xi32, #tpu.memory_space<smem>>
    %297 = arith.index_cast %296 : i32 to index
    %c0_135 = arith.constant 0 : index
    %298 = vector.load %arg2[%297, %c0_135] : memref<51x128xf32, #tpu.memory_space<vmem>>, vector<1x128xf32>
    %299 = tpu.concatenate %256, %262, %268, %274, %280, %286, %292, %298 in 0 : vector<1x128xf32>, vector<1x128xf32>, vector<1x128xf32>, vector<1x128xf32>, vector<1x128xf32>, vector<1x128xf32>, vector<1x128xf32>, vector<1x128xf32> -> vector<8x128xf32>
    %c40 = arith.constant 40 : index
    %c0_136 = arith.constant 0 : index
    %300 = vector.load %arg3[%c40, %c0_136] : memref<64x128xf32, #tpu.memory_space<vmem>>, vector<8x128xf32>
    tpu.vector_store %arg3[%c40, %c0_136], %299 {strides = array<i32>} : memref<64x128xf32, #tpu.memory_space<vmem>>, vector<8x128xf32>,
    %c48_i32 = arith.constant 48 : i32
    %301 = arith.addi %0, %c48_i32 : i32
    %c0_i32_137 = arith.constant 0 : i32
    %302 = arith.addi %301, %c0_i32_137 : i32
    %303 = arith.index_cast %302 : i32 to index
    %304 = memref.load %arg1[%303] : memref<64xi32, #tpu.memory_space<smem>>
    %305 = arith.index_cast %304 : i32 to index
    %c0_138 = arith.constant 0 : index
    %306 = vector.load %arg2[%305, %c0_138] : memref<51x128xf32, #tpu.memory_space<vmem>>, vector<1x128xf32>
    %c48_i32_139 = arith.constant 48 : i32
    %307 = arith.addi %0, %c48_i32_139 : i32
    %c1_i32_140 = arith.constant 1 : i32
    %308 = arith.addi %307, %c1_i32_140 : i32
    %309 = arith.index_cast %308 : i32 to index
    %310 = memref.load %arg1[%309] : memref<64xi32, #tpu.memory_space<smem>>
    %311 = arith.index_cast %310 : i32 to index
    %c0_141 = arith.constant 0 : index
    %312 = vector.load %arg2[%311, %c0_141] : memref<51x128xf32, #tpu.memory_space<vmem>>, vector<1x128xf32>
    %c48_i32_142 = arith.constant 48 : i32
    %313 = arith.addi %0, %c48_i32_142 : i32
    %c2_i32_143 = arith.constant 2 : i32
    %314 = arith.addi %313, %c2_i32_143 : i32
    %315 = arith.index_cast %314 : i32 to index
    %316 = memref.load %arg1[%315] : memref<64xi32, #tpu.memory_space<smem>>
    %317 = arith.index_cast %316 : i32 to index
    %c0_144 = arith.constant 0 : index
    %318 = vector.load %arg2[%317, %c0_144] : memref<51x128xf32, #tpu.memory_space<vmem>>, vector<1x128xf32>
    %c48_i32_145 = arith.constant 48 : i32
    %319 = arith.addi %0, %c48_i32_145 : i32
    %c3_i32_146 = arith.constant 3 : i32
    %320 = arith.addi %319, %c3_i32_146 : i32
    %321 = arith.index_cast %320 : i32 to index
    %322 = memref.load %arg1[%321] : memref<64xi32, #tpu.memory_space<smem>>
    %323 = arith.index_cast %322 : i32 to index
    %c0_147 = arith.constant 0 : index
    %324 = vector.load %arg2[%323, %c0_147] : memref<51x128xf32, #tpu.memory_space<vmem>>, vector<1x128xf32>
    %c48_i32_148 = arith.constant 48 : i32
    %325 = arith.addi %0, %c48_i32_148 : i32
    %c4_i32_149 = arith.constant 4 : i32
    %326 = arith.addi %325, %c4_i32_149 : i32
    %327 = arith.index_cast %326 : i32 to index
    %328 = memref.load %arg1[%327] : memref<64xi32, #tpu.memory_space<smem>>
    %329 = arith.index_cast %328 : i32 to index
    %c0_150 = arith.constant 0 : index
    %330 = vector.load %arg2[%329, %c0_150] : memref<51x128xf32, #tpu.memory_space<vmem>>, vector<1x128xf32>
    %c48_i32_151 = arith.constant 48 : i32
    %331 = arith.addi %0, %c48_i32_151 : i32
    %c5_i32_152 = arith.constant 5 : i32
    %332 = arith.addi %331, %c5_i32_152 : i32
    %333 = arith.index_cast %332 : i32 to index
    %334 = memref.load %arg1[%333] : memref<64xi32, #tpu.memory_space<smem>>
    %335 = arith.index_cast %334 : i32 to index
    %c0_153 = arith.constant 0 : index
    %336 = vector.load %arg2[%335, %c0_153] : memref<51x128xf32, #tpu.memory_space<vmem>>, vector<1x128xf32>
    %c48_i32_154 = arith.constant 48 : i32
    %337 = arith.addi %0, %c48_i32_154 : i32
    %c6_i32_155 = arith.constant 6 : i32
    %338 = arith.addi %337, %c6_i32_155 : i32
    %339 = arith.index_cast %338 : i32 to index
    %340 = memref.load %arg1[%339] : memref<64xi32, #tpu.memory_space<smem>>
    %341 = arith.index_cast %340 : i32 to index
    %c0_156 = arith.constant 0 : index
    %342 = vector.load %arg2[%341, %c0_156] : memref<51x128xf32, #tpu.memory_space<vmem>>, vector<1x128xf32>
    %c48_i32_157 = arith.constant 48 : i32
    %343 = arith.addi %0, %c48_i32_157 : i32
    %c7_i32_158 = arith.constant 7 : i32
    %344 = arith.addi %343, %c7_i32_158 : i32
    %345 = arith.index_cast %344 : i32 to index
    %346 = memref.load %arg1[%345] : memref<64xi32, #tpu.memory_space<smem>>
    %347 = arith.index_cast %346 : i32 to index
    %c0_159 = arith.constant 0 : index
    %348 = vector.load %arg2[%347, %c0_159] : memref<51x128xf32, #tpu.memory_space<vmem>>, vector<1x128xf32>
    %349 = tpu.concatenate %306, %312, %318, %324, %330, %336, %342, %348 in 0 : vector<1x128xf32>, vector<1x128xf32>, vector<1x128xf32>, vector<1x128xf32>, vector<1x128xf32>, vector<1x128xf32>, vector<1x128xf32>, vector<1x128xf32> -> vector<8x128xf32>
    %c48 = arith.constant 48 : index
    %c0_160 = arith.constant 0 : index
    %350 = vector.load %arg3[%c48, %c0_160] : memref<64x128xf32, #tpu.memory_space<vmem>>, vector<8x128xf32>
    tpu.vector_store %arg3[%c48, %c0_160], %349 {strides = array<i32>} : memref<64x128xf32, #tpu.memory_space<vmem>>, vector<8x128xf32>,
    %c56_i32 = arith.constant 56 : i32
    %351 = arith.addi %0, %c56_i32 : i32
    %c0_i32_161 = arith.constant 0 : i32
    %352 = arith.addi %351, %c0_i32_161 : i32
    %353 = arith.index_cast %352 : i32 to index
    %354 = memref.load %arg1[%353] : memref<64xi32, #tpu.memory_space<smem>>
    %355 = arith.index_cast %354 : i32 to index
    %c0_162 = arith.constant 0 : index
    %356 = vector.load %arg2[%355, %c0_162] : memref<51x128xf32, #tpu.memory_space<vmem>>, vector<1x128xf32>
    %c56_i32_163 = arith.constant 56 : i32
    %357 = arith.addi %0, %c56_i32_163 : i32
    %c1_i32_164 = arith.constant 1 : i32
    %358 = arith.addi %357, %c1_i32_164 : i32
    %359 = arith.index_cast %358 : i32 to index
    %360 = memref.load %arg1[%359] : memref<64xi32, #tpu.memory_space<smem>>
    %361 = arith.index_cast %360 : i32 to index
    %c0_165 = arith.constant 0 : index
    %362 = vector.load %arg2[%361, %c0_165] : memref<51x128xf32, #tpu.memory_space<vmem>>, vector<1x128xf32>
    %c56_i32_166 = arith.constant 56 : i32
    %363 = arith.addi %0, %c56_i32_166 : i32
    %c2_i32_167 = arith.constant 2 : i32
    %364 = arith.addi %363, %c2_i32_167 : i32
    %365 = arith.index_cast %364 : i32 to index
    %366 = memref.load %arg1[%365] : memref<64xi32, #tpu.memory_space<smem>>
    %367 = arith.index_cast %366 : i32 to index
    %c0_168 = arith.constant 0 : index
    %368 = vector.load %arg2[%367, %c0_168] : memref<51x128xf32, #tpu.memory_space<vmem>>, vector<1x128xf32>
    %c56_i32_169 = arith.constant 56 : i32
    %369 = arith.addi %0, %c56_i32_169 : i32
    %c3_i32_170 = arith.constant 3 : i32
    %370 = arith.addi %369, %c3_i32_170 : i32
    %371 = arith.index_cast %370 : i32 to index
    %372 = memref.load %arg1[%371] : memref<64xi32, #tpu.memory_space<smem>>
    %373 = arith.index_cast %372 : i32 to index
    %c0_171 = arith.constant 0 : index
    %374 = vector.load %arg2[%373, %c0_171] : memref<51x128xf32, #tpu.memory_space<vmem>>, vector<1x128xf32>
    %c56_i32_172 = arith.constant 56 : i32
    %375 = arith.addi %0, %c56_i32_172 : i32
    %c4_i32_173 = arith.constant 4 : i32
    %376 = arith.addi %375, %c4_i32_173 : i32
    %377 = arith.index_cast %376 : i32 to index
    %378 = memref.load %arg1[%377] : memref<64xi32, #tpu.memory_space<smem>>
    %379 = arith.index_cast %378 : i32 to index
    %c0_174 = arith.constant 0 : index
    %380 = vector.load %arg2[%379, %c0_174] : memref<51x128xf32, #tpu.memory_space<vmem>>, vector<1x128xf32>
    %c56_i32_175 = arith.constant 56 : i32
    %381 = arith.addi %0, %c56_i32_175 : i32
    %c5_i32_176 = arith.constant 5 : i32
    %382 = arith.addi %381, %c5_i32_176 : i32
    %383 = arith.index_cast %382 : i32 to index
    %384 = memref.load %arg1[%383] : memref<64xi32, #tpu.memory_space<smem>>
    %385 = arith.index_cast %384 : i32 to index
    %c0_177 = arith.constant 0 : index
    %386 = vector.load %arg2[%385, %c0_177] : memref<51x128xf32, #tpu.memory_space<vmem>>, vector<1x128xf32>
    %c56_i32_178 = arith.constant 56 : i32
    %387 = arith.addi %0, %c56_i32_178 : i32
    %c6_i32_179 = arith.constant 6 : i32
    %388 = arith.addi %387, %c6_i32_179 : i32
    %389 = arith.index_cast %388 : i32 to index
    %390 = memref.load %arg1[%389] : memref<64xi32, #tpu.memory_space<smem>>
    %391 = arith.index_cast %390 : i32 to index
    %c0_180 = arith.constant 0 : index
    %392 = vector.load %arg2[%391, %c0_180] : memref<51x128xf32, #tpu.memory_space<vmem>>, vector<1x128xf32>
    %c56_i32_181 = arith.constant 56 : i32
    %393 = arith.addi %0, %c56_i32_181 : i32
    %c7_i32_182 = arith.constant 7 : i32
    %394 = arith.addi %393, %c7_i32_182 : i32
    %395 = arith.index_cast %394 : i32 to index
    %396 = memref.load %arg1[%395] : memref<64xi32, #tpu.memory_space<smem>>
    %397 = arith.index_cast %396 : i32 to index
    %c0_183 = arith.constant 0 : index
    %398 = vector.load %arg2[%397, %c0_183] : memref<51x128xf32, #tpu.memory_space<vmem>>, vector<1x128xf32>
    %399 = tpu.concatenate %356, %362, %368, %374, %380, %386, %392, %398 in 0 : vector<1x128xf32>, vector<1x128xf32>, vector<1x128xf32>, vector<1x128xf32>, vector<1x128xf32>, vector<1x128xf32>, vector<1x128xf32>, vector<1x128xf32> -> vector<8x128xf32>
    %c56 = arith.constant 56 : index
    %c0_184 = arith.constant 0 : index
    %400 = vector.load %arg3[%c56, %c0_184] : memref<64x128xf32, #tpu.memory_space<vmem>>, vector<8x128xf32>
    tpu.vector_store %arg3[%c56, %c0_184], %399 {strides = array<i32>} : memref<64x128xf32, #tpu.memory_space<vmem>>, vector<8x128xf32>,
    return
  }
  func.func @transform_0(%arg0: i32, %arg1: memref<64xi32, #tpu.memory_space<smem>>) -> (i32, i32) {
    %c0_i32 = arith.constant 0 : i32
    %c0_i32_0 = arith.constant 0 : i32
    %c0_i32_1 = arith.constant 0 : i32
    return %c0_i32, %c0_i32_0 : i32, i32
  }
  func.func @transform_1(%arg0: i32, %arg1: memref<64xi32, #tpu.memory_space<smem>>) -> (i32, i32) {
    %c0_i32 = arith.constant 0 : i32
    %c0_i32_0 = arith.constant 0 : i32
    return %arg0, %c0_i32 : i32, i32
  }
}

</mosaic_0001>

<llo_original>
// kernel: _pallas_gather_padded.1
$region0: #{_pallas_gather_padded.1}
  #allocation0 [shape = 'u32[]', space=smem, size = 0x4, offset = 0x4, fixed_abs, tag = 'smem constant byte address 0x4 - core index']
  #allocation1 [shape = 'u32[144,128]{1,0:T(1,128)}', space=vmem, size = 0x12000, scoped, tag = 'internal scratch']
  #allocation2 [shape = 's32[1]{0}', space=sflag, size = 0x4, scoped, tag = 'scoped memory for _pallas_gather_padded.1']
  #allocation3 [shape = 'u8[512]{0}', space=smem, size = 0x200, scoped, tag = 'prefetched SMEM operand 0']
  %s0 = inlined_call_operand.vmem [shape: s32[64], index: 0, kind: input, shape index: {}]
  %s1 = inlined_call_operand.hbm [shape: f32[51,128], index: 1, kind: input, shape index: {}]
  %s2 = inlined_call_operand.hbm [shape: f32[64,128], index: 2, kind: output, shape index: {}]
  %s3 = sld [smem:[#allocation0]]
  $region18: #{_pallas_gather_padded.1} parent=0
    _
  %s5 = ssub.s32 1, %s3
  %s6 = scalar_select 0, %s5, %s3
  %s7 = sshll.u32 %s0, 4
  %s8 = int_to_ptr.vmem [resolvable:$true] %s7
  %10 = dma.vmem_to_smem %s8, 16, [#allocation3], [#allocation2]
  %11 = dma.done [#allocation2], 16
  %12 = sfence
  $region1: #{_pallas_gather_padded.1} parent=0
    #allocation4 [shape = 'u8[28672]{0}', space=vmem, size = 0x7000, scoped, tag = 'input window, operand 1, single buffered']
    #allocation5 [shape = 's32[1]{0}', space=sflag, size = 0x4, scoped, tag = 'scoped memory for _pallas_gather_padded.1']
    #allocation6 [shape = 's32[1]{0}', space=sflag, size = 0x4, scoped, tag = 'scoped memory for _pallas_gather_padded.1']
    #allocation7 [shape = 'u8[32768]{0}', space=vmem, size = 0x8000, scoped, tag = 'output window, operand 0, single buffered']
    %13 = vsyncpa [#allocation5], 0
    %14 = vsyncpa [#allocation6], 0
    // Predicated region
    $region2: #{_pallas_gather_padded.1} parent=1 // pred_check
      _
    $region3: #{_pallas_gather_padded.1} parent=1 // pred_check_branch
      %16 = sbr.rel (0) target = $region5
    $region4: #{_pallas_gather_padded.1} parent=1 // pred_region
      %s18 = ssub.s32 896, 896
      %19 = vsyncadd [#allocation5], %s18
      %s20 = sshll.u32 [#allocation4], 4
      %s21 = int_to_ptr.vmem [resolvable:$true] %s20
      %26 = dma.hbm_to_vmem [thread:$0]  %s1, 896, %s21, [#allocation5], 128, 128, 8
    $region5: #{_pallas_gather_padded.1} parent=1 // pred_fallthru
      _
    // Predicated region
    $region6: #{_pallas_gather_padded.1} parent=1 // pred_check
      _
    $region7: #{_pallas_gather_padded.1} parent=1 // pred_check_branch
      %28 = sbr.rel (0) target = $region9
    $region8: #{_pallas_gather_padded.1} parent=1 // pred_region
      %29 = dma.done [#allocation5], 896
    $region9: #{_pallas_gather_padded.1} parent=1 // pred_fallthru
      _
    %s30 = smul.u32 0, 64
    %s31 = sld [smem:[#allocation3 + %s30]]
    %s32 = scalar_lea.vmem [#allocation4], %s31
    %v33 = vld [vmem:[%s32] sm:$0x1]
    %s34 = sadd.s32 %s30, 1
    %s35 = sld [smem:[#allocation3 + %s34]]
    %s36 = scalar_lea.vmem [#allocation4], %s35
    %v37 = vld [vmem:[%s36] sm:$0x1]
    %s38 = sadd.s32 %s30, 2
    %s39 = sld [smem:[#allocation3 + %s38]]
    %s40 = scalar_lea.vmem [#allocation4], %s39
    %v41 = vld [vmem:[%s40] sm:$0x1]
    %s42 = sadd.s32 %s30, 3
    %s43 = sld [smem:[#allocation3 + %s42]]
    %s44 = scalar_lea.vmem [#allocation4], %s43
    %v45 = vld [vmem:[%s44] sm:$0x1]
    %s46 = sadd.s32 %s30, 4
    %s47 = sld [smem:[#allocation3 + %s46]]
    %s48 = scalar_lea.vmem [#allocation4], %s47
    %v49 = vld [vmem:[%s48] sm:$0x1]
    %s50 = sadd.s32 %s30, 5
    %s51 = sld [smem:[#allocation3 + %s50]]
    %s52 = scalar_lea.vmem [#allocation4], %s51
    %v53 = vld [vmem:[%s52] sm:$0x1]
    %s54 = sadd.s32 %s30, 6
    %s55 = sld [smem:[#allocation3 + %s54]]
    %s56 = scalar_lea.vmem [#allocation4], %s55
    %v57 = vld [vmem:[%s56] sm:$0x1]
    %s58 = sadd.s32 %s30, 7
    %s59 = sld [smem:[#allocation3 + %s58]]
    %s60 = scalar_lea.vmem [#allocation4], %s59
    %v61 = vld [vmem:[%s60] sm:$0x1]
    %v63 = vrot.slane %v37, 7
    %v66 = vrot.slane %v41, 6
    %v69 = vrot.slane %v45, 5
    %v72 = vrot.slane %v49, 4
    %v75 = vrot.slane %v53, 3
    %v78 = vrot.slane %v57, 2
    %v81 = vrot.slane %v61, 1
    %vm83 = vcmask 1040384
    %v84 = vsel %vm83, %v33, %v63
    %vm85 = vcmask 1041408
    %v86 = vsel %vm85, %v84, %v66
    %vm87 = vcmask 1042432
    %v88 = vsel %vm87, %v86, %v69
    %vm89 = vcmask 1043456
    %v90 = vsel %vm89, %v88, %v72
    %vm91 = vcmask 1044480
    %v92 = vsel %vm91, %v90, %v75
    %vm93 = vcmask 1045504
    %v94 = vsel %vm93, %v92, %v78
    %vm95 = vcmask 1046528
    %v96 = vsel %vm95, %v94, %v81
    %97 = vst [vmem:[#allocation7] sm:$0xff] %v96
    %s98 = sadd.s32 %s30, 8
    %s99 = sld [smem:[#allocation3 + %s98]]
    %s100 = scalar_lea.vmem [#allocation4], %s99
    %v101 = vld [vmem:[%s100] sm:$0x1]
    %s102 = sadd.s32 %s30, 9
    %s103 = sld [smem:[#allocation3 + %s102]]
    %s104 = scalar_lea.vmem [#allocation4], %s103
    %v105 = vld [vmem:[%s104] sm:$0x1]
    %s106 = sadd.s32 %s30, 10
    %s107 = sld [smem:[#allocation3 + %s106]]
    %s108 = scalar_lea.vmem [#allocation4], %s107
    %v109 = vld [vmem:[%s108] sm:$0x1]
    %s110 = sadd.s32 %s30, 11
    %s111 = sld [smem:[#allocation3 + %s110]]
    %s112 = scalar_lea.vmem [#allocation4], %s111
    %v113 = vld [vmem:[%s112] sm:$0x1]
    %s114 = sadd.s32 %s30, 12
    %s115 = sld [smem:[#allocation3 + %s114]]
    %s116 = scalar_lea.vmem [#allocation4], %s115
    %v117 = vld [vmem:[%s116] sm:$0x1]
    %s118 = sadd.s32 %s30, 13
    %s119 = sld [smem:[#allocation3 + %s118]]
    %s120 = scalar_lea.vmem [#allocation4], %s119
    %v121 = vld [vmem:[%s120] sm:$0x1]
    %s122 = sadd.s32 %s30, 14
    %s123 = sld [smem:[#allocation3 + %s122]]
    %s124 = scalar_lea.vmem [#allocation4], %s123
    %v125 = vld [vmem:[%s124] sm:$0x1]
    %s126 = sadd.s32 %s30, 15
    %s127 = sld [smem:[#allocation3 + %s126]]
    %s128 = scalar_lea.vmem [#allocation4], %s127
    %v129 = vld [vmem:[%s128] sm:$0x1]
    %v131 = vrot.slane %v105, 7
    %v134 = vrot.slane %v109, 6
    %v137 = vrot.slane %v113, 5
    %v140 = vrot.slane %v117, 4
    %v143 = vrot.slane %v121, 3
    %v146 = vrot.slane %v125, 2
    %v149 = vrot.slane %v129, 1
    %v151 = vsel %vm83, %v101, %v131
    %v152 = vsel %vm85, %v151, %v134
    %v153 = vsel %vm87, %v152, %v137
    %v154 = vsel %vm89, %v153, %v140
    %v155 = vsel %vm91, %v154, %v143
    %v156 = vsel %vm93, %v155, %v146
    %v157 = vsel %vm95, %v156, %v149
    %158 = vst [vmem:[#allocation7 + $0x8] sm:$0xff] %v157
    %s159 = sadd.s32 %s30, 16
    %s160 = sld [smem:[#allocation3 + %s159]]
    %s161 = scalar_lea.vmem [#allocation4], %s160
    %v162 = vld [vmem:[%s161] sm:$0x1]
    %s163 = sadd.s32 %s30, 17
    %s164 = sld [smem:[#allocation3 + %s163]]
    %s165 = scalar_lea.vmem [#allocation4], %s164
    %v166 = vld [vmem:[%s165] sm:$0x1]
    %s167 = sadd.s32 %s30, 18
    %s168 = sld [smem:[#allocation3 + %s167]]
    %s169 = scalar_lea.vmem [#allocation4], %s168
    %v170 = vld [vmem:[%s169] sm:$0x1]
    %s171 = sadd.s32 %s30, 19
    %s172 = sld [smem:[#allocation3 + %s171]]
    %s173 = scalar_lea.vmem [#allocation4], %s172
    %v174 = vld [vmem:[%s173] sm:$0x1]
    %s175 = sadd.s32 %s30, 20
    %s176 = sld [smem:[#allocation3 + %s175]]
    %s177 = scalar_lea.vmem [#allocation4], %s176
    %v178 = vld [vmem:[%s177] sm:$0x1]
    %s179 = sadd.s32 %s30, 21
    %s180 = sld [smem:[#allocation3 + %s179]]
    %s181 = scalar_lea.vmem [#allocation4], %s180
    %v182 = vld [vmem:[%s181] sm:$0x1]
    %s183 = sadd.s32 %s30, 22
    %s184 = sld [smem:[#allocation3 + %s183]]
    %s185 = scalar_lea.vmem [#allocation4], %s184
    %v186 = vld [vmem:[%s185] sm:$0x1]
    %s187 = sadd.s32 %s30, 23
    %s188 = sld [smem:[#allocation3 + %s187]]
    %s189 = scalar_lea.vmem [#allocation4], %s188
    %v190 = vld [vmem:[%s189] sm:$0x1]
    %v192 = vrot.slane %v166, 7
    %v195 = vrot.slane %v170, 6
    %v198 = vrot.slane %v174, 5
    %v201 = vrot.slane %v178, 4
    %v204 = vrot.slane %v182, 3
    %v207 = vrot.slane %v186, 2
    %v210 = vrot.slane %v190, 1
    %v212 = vsel %vm83, %v162, %v192
    %v213 = vsel %vm85, %v212, %v195
    %v214 = vsel %vm87, %v213, %v198
    %v215 = vsel %vm89, %v214, %v201
    %v216 = vsel %vm91, %v215, %v204
    %v217 = vsel %vm93, %v216, %v207
    %v218 = vsel %vm95, %v217, %v210
    %219 = vst [vmem:[#allocation7 + $0x10] sm:$0xff] %v218
    %s220 = sadd.s32 %s30, 24
    %s221 = sld [smem:[#allocation3 + %s220]]
    %s222 = scalar_lea.vmem [#allocation4], %s221
    %v223 = vld [vmem:[%s222] sm:$0x1]
    %s224 = sadd.s32 %s30, 25
    %s225 = sld [smem:[#allocation3 + %s224]]
    %s226 = scalar_lea.vmem [#allocation4], %s225
    %v227 = vld [vmem:[%s226] sm:$0x1]
    %s228 = sadd.s32 %s30, 26
    %s229 = sld [smem:[#allocation3 + %s228]]
    %s230 = scalar_lea.vmem [#allocation4], %s229
    %v231 = vld [vmem:[%s230] sm:$0x1]
    %s232 = sadd.s32 %s30, 27
    %s233 = sld [smem:[#allocation3 + %s232]]
    %s234 = scalar_lea.vmem [#allocation4], %s233
    %v235 = vld [vmem:[%s234] sm:$0x1]
    %s236 = sadd.s32 %s30, 28
    %s237 = sld [smem:[#allocation3 + %s236]]
    %s238 = scalar_lea.vmem [#allocation4], %s237
    %v239 = vld [vmem:[%s238] sm:$0x1]
    %s240 = sadd.s32 %s30, 29
    %s241 = sld [smem:[#allocation3 + %s240]]
    %s242 = scalar_lea.vmem [#allocation4], %s241
    %v243 = vld [vmem:[%s242] sm:$0x1]
    %s244 = sadd.s32 %s30, 30
    %s245 = sld [smem:[#allocation3 + %s244]]
    %s246 = scalar_lea.vmem [#allocation4], %s245
    %v247 = vld [vmem:[%s246] sm:$0x1]
    %s248 = sadd.s32 %s30, 31
    %s249 = sld [smem:[#allocation3 + %s248]]
    %s250 = scalar_lea.vmem [#allocation4], %s249
    %v251 = vld [vmem:[%s250] sm:$0x1]
    %v253 = vrot.slane %v227, 7
    %v256 = vrot.slane %v231, 6
    %v259 = vrot.slane %v235, 5
    %v262 = vrot.slane %v239, 4
    %v265 = vrot.slane %v243, 3
    %v268 = vrot.slane %v247, 2
    %v271 = vrot.slane %v251, 1
    %v273 = vsel %vm83, %v223, %v253
    %v274 = vsel %vm85, %v273, %v256
    %v275 = vsel %vm87, %v274, %v259
    %v276 = vsel %vm89, %v275, %v262
    %v277 = vsel %vm91, %v276, %v265
    %v278 = vsel %vm93, %v277, %v268
    %v279 = vsel %vm95, %v278, %v271
    %280 = vst [vmem:[#allocation7 + $0x18] sm:$0xff] %v279
    %s281 = sadd.s32 %s30, 32
    %s282 = sld [smem:[#allocation3 + %s281]]
    %s283 = scalar_lea.vmem [#allocation4], %s282
    %v284 = vld [vmem:[%s283] sm:$0x1]
    %s285 = sadd.s32 %s30, 33
    %s286 = sld [smem:[#allocation3 + %s285]]
    %s287 = scalar_lea.vmem [#allocation4], %s286
    %v288 = vld [vmem:[%s287] sm:$0x1]
    %s289 = sadd.s32 %s30, 34
    %s290 = sld [smem:[#allocation3 + %s289]]
    %s291 = scalar_lea.vmem [#allocation4], %s290
    %v292 = vld [vmem:[%s291] sm:$0x1]
    %s293 = sadd.s32 %s30, 35
    %s294 = sld [smem:[#allocation3 + %s293]]
    %s295 = scalar_lea.vmem [#allocation4], %s294
    %v296 = vld [vmem:[%s295] sm:$0x1]
    %s297 = sadd.s32 %s30, 36
    %s298 = sld [smem:[#allocation3 + %s297]]
    %s299 = scalar_lea.vmem [#allocation4], %s298
    %v300 = vld [vmem:[%s299] sm:$0x1]
    %s301 = sadd.s32 %s30, 37
    %s302 = sld [smem:[#allocation3 + %s301]]
    %s303 = scalar_lea.vmem [#allocation4], %s302
    %v304 = vld [vmem:[%s303] sm:$0x1]
    %s305 = sadd.s32 %s30, 38
    %s306 = sld [smem:[#allocation3 + %s305]]
    %s307 = scalar_lea.vmem [#allocation4], %s306
    %v308 = vld [vmem:[%s307] sm:$0x1]
    %s309 = sadd.s32 %s30, 39
    %s310 = sld [smem:[#allocation3 + %s309]]
    %s311 = scalar_lea.vmem [#allocation4], %s310
    %v312 = vld [vmem:[%s311] sm:$0x1]
    %v314 = vrot.slane %v288, 7
    %v317 = vrot.slane %v292, 6
    %v320 = vrot.slane %v296, 5
    %v323 = vrot.slane %v300, 4
    %v326 = vrot.slane %v304, 3
    %v329 = vrot.slane %v308, 2
    %v332 = vrot.slane %v312, 1
    %v334 = vsel %vm83, %v284, %v314
    %v335 = vsel %vm85, %v334, %v317
    %v336 = vsel %vm87, %v335, %v320
    %v337 = vsel %vm89, %v336, %v323
    %v338 = vsel %vm91, %v337, %v326
    %v339 = vsel %vm93, %v338, %v329
    %v340 = vsel %vm95, %v339, %v332
    %341 = vst [vmem:[#allocation7 + $0x20] sm:$0xff] %v340
    %s342 = sadd.s32 %s30, 40
    %s343 = sld [smem:[#allocation3 + %s342]]
    %s344 = scalar_lea.vmem [#allocation4], %s343
    %v345 = vld [vmem:[%s344] sm:$0x1]
    %s346 = sadd.s32 %s30, 41
    %s347 = sld [smem:[#allocation3 + %s346]]
    %s348 = scalar_lea.vmem [#allocation4], %s347
    %v349 = vld [vmem:[%s348] sm:$0x1]
    %s350 = sadd.s32 %s30, 42
    %s351 = sld [smem:[#allocation3 + %s350]]
    %s352 = scalar_lea.vmem [#allocation4], %s351
    %v353 = vld [vmem:[%s352] sm:$0x1]
    %s354 = sadd.s32 %s30, 43
    %s355 = sld [smem:[#allocation3 + %s354]]
    %s356 = scalar_lea.vmem [#allocation4], %s355
    %v357 = vld [vmem:[%s356] sm:$0x1]
    %s358 = sadd.s32 %s30, 44
    %s359 = sld [smem:[#allocation3 + %s358]]
    %s360 = scalar_lea.vmem [#allocation4], %s359
    %v361 = vld [vmem:[%s360] sm:$0x1]
    %s362 = sadd.s32 %s30, 45
    %s363 = sld [smem:[#allocation3 + %s362]]
    %s364 = scalar_lea.vmem [#allocation4], %s363
    %v365 = vld [vmem:[%s364] sm:$0x1]
    %s366 = sadd.s32 %s30, 46
    %s367 = sld [smem:[#allocation3 + %s366]]
    %s368 = scalar_lea.vmem [#allocation4], %s367
    %v369 = vld [vmem:[%s368] sm:$0x1]
    %s370 = sadd.s32 %s30, 47
    %s371 = sld [smem:[#allocation3 + %s370]]
    %s372 = scalar_lea.vmem [#allocation4], %s371
    %v373 = vld [vmem:[%s372] sm:$0x1]
    %v375 = vrot.slane %v349, 7
    %v378 = vrot.slane %v353, 6
    %v381 = vrot.slane %v357, 5
    %v384 = vrot.slane %v361, 4
    %v387 = vrot.slane %v365, 3
    %v390 = vrot.slane %v369, 2
    %v393 = vrot.slane %v373, 1
    %v395 = vsel %vm83, %v345, %v375
    %v396 = vsel %vm85, %v395, %v378
    %v397 = vsel %vm87, %v396, %v381
    %v398 = vsel %vm89, %v397, %v384
    %v399 = vsel %vm91, %v398, %v387
    %v400 = vsel %vm93, %v399, %v390
    %v401 = vsel %vm95, %v400, %v393
    %402 = vst [vmem:[#allocation7 + $0x28] sm:$0xff] %v401
    %s403 = sadd.s32 %s30, 48
    %s404 = sld [smem:[#allocation3 + %s403]]
    %s405 = scalar_lea.vmem [#allocation4], %s404
    %v406 = vld [vmem:[%s405] sm:$0x1]
    %s407 = sadd.s32 %s30, 49
    %s408 = sld [smem:[#allocation3 + %s407]]
    %s409 = scalar_lea.vmem [#allocation4], %s408
    %v410 = vld [vmem:[%s409] sm:$0x1]
    %s411 = sadd.s32 %s30, 50
    %s412 = sld [smem:[#allocation3 + %s411]]
    %s413 = scalar_lea.vmem [#allocation4], %s412
    %v414 = vld [vmem:[%s413] sm:$0x1]
    %s415 = sadd.s32 %s30, 51
    %s416 = sld [smem:[#allocation3 + %s415]]
    %s417 = scalar_lea.vmem [#allocation4], %s416
    %v418 = vld [vmem:[%s417] sm:$0x1]
    %s419 = sadd.s32 %s30, 52
    %s420 = sld [smem:[#allocation3 + %s419]]
    %s421 = scalar_lea.vmem [#allocation4], %s420
    %v422 = vld [vmem:[%s421] sm:$0x1]
    %s423 = sadd.s32 %s30, 53
    %s424 = sld [smem:[#allocation3 + %s423]]
    %s425 = scalar_lea.vmem [#allocation4], %s424
    %v426 = vld [vmem:[%s425] sm:$0x1]
    %s427 = sadd.s32 %s30, 54
    %s428 = sld [smem:[#allocation3 + %s427]]
    %s429 = scalar_lea.vmem [#allocation4], %s428
    %v430 = vld [vmem:[%s429] sm:$0x1]
    %s431 = sadd.s32 %s30, 55
    %s432 = sld [smem:[#allocation3 + %s431]]
    %s433 = scalar_lea.vmem [#allocation4], %s432
    %v434 = vld [vmem:[%s433] sm:$0x1]
    %v436 = vrot.slane %v410, 7
    %v439 = vrot.slane %v414, 6
    %v442 = vrot.slane %v418, 5
    %v445 = vrot.slane %v422, 4
    %v448 = vrot.slane %v426, 3
    %v451 = vrot.slane %v430, 2
    %v454 = vrot.slane %v434, 1
    %v456 = vsel %vm83, %v406, %v436
    %v457 = vsel %vm85, %v456, %v439
    %v458 = vsel %vm87, %v457, %v442
    %v459 = vsel %vm89, %v458, %v445
    %v460 = vsel %vm91, %v459, %v448
    %v461 = vsel %vm93, %v460, %v451
    %v462 = vsel %vm95, %v461, %v454
    %463 = vst [vmem:[#allocation7 + $0x30] sm:$0xff] %v462
    %s464 = sadd.s32 %s30, 56
    %s465 = sld [smem:[#allocation3 + %s464]]
    %s466 = scalar_lea.vmem [#allocation4], %s465
    %v467 = vld [vmem:[%s466] sm:$0x1]
    %s468 = sadd.s32 %s30, 57
    %s469 = sld [smem:[#allocation3 + %s468]]
    %s470 = scalar_lea.vmem [#allocation4], %s469
    %v471 = vld [vmem:[%s470] sm:$0x1]
    %s472 = sadd.s32 %s30, 58
    %s473 = sld [smem:[#allocation3 + %s472]]
    %s474 = scalar_lea.vmem [#allocation4], %s473
    %v475 = vld [vmem:[%s474] sm:$0x1]
    %s476 = sadd.s32 %s30, 59
    %s477 = sld [smem:[#allocation3 + %s476]]
    %s478 = scalar_lea.vmem [#allocation4], %s477
    %v479 = vld [vmem:[%s478] sm:$0x1]
    %s480 = sadd.s32 %s30, 60
    %s481 = sld [smem:[#allocation3 + %s480]]
    %s482 = scalar_lea.vmem [#allocation4], %s481
    %v483 = vld [vmem:[%s482] sm:$0x1]
    %s484 = sadd.s32 %s30, 61
    %s485 = sld [smem:[#allocation3 + %s484]]
    %s486 = scalar_lea.vmem [#allocation4], %s485
    %v487 = vld [vmem:[%s486] sm:$0x1]
    %s488 = sadd.s32 %s30, 62
    %s489 = sld [smem:[#allocation3 + %s488]]
    %s490 = scalar_lea.vmem [#allocation4], %s489
    %v491 = vld [vmem:[%s490] sm:$0x1]
    %s492 = sadd.s32 %s30, 63
    %s493 = sld [smem:[#allocation3 + %s492]]
    %s494 = scalar_lea.vmem [#allocation4], %s493
    %v495 = vld [vmem:[%s494] sm:$0x1]
    %v497 = vrot.slane %v471, 7
    %v500 = vrot.slane %v475, 6
    %v503 = vrot.slane %v479, 5
    %v506 = vrot.slane %v483, 4
    %v509 = vrot.slane %v487, 3
    %v512 = vrot.slane %v491, 2
    %v515 = vrot.slane %v495, 1
    %v517 = vsel %vm83, %v467, %v497
    %v518 = vsel %vm85, %v517, %v500
    %v519 = vsel %vm87, %v518, %v503
    %v520 = vsel %vm89, %v519, %v506
    %v521 = vsel %vm91, %v520, %v509
    %v522 = vsel %vm93, %v521, %v512
    %v523 = vsel %vm95, %v522, %v515
    %524 = vst [vmem:[#allocation7 + $0x38] sm:$0xff] %v523
    // Predicated region
    $region10: #{_pallas_gather_padded.1} parent=1 // pred_check
      _
    $region11: #{_pallas_gather_padded.1} parent=1 // pred_check_branch
      %526 = sbr.rel (0) target = $region13
    $region12: #{_pallas_gather_padded.1} parent=1 // pred_region
      %s528 = ssub.s32 1024, 1024
      %529 = vsyncadd [#allocation6], %s528
      %s530 = sshll.u32 [#allocation7], 4
      %s531 = int_to_ptr.vmem [resolvable:$true] %s530
      %536 = dma.vmem_to_hbm [thread:$0]  %s531, 1024, %s2, [#allocation6], 128, 128, 8
    $region13: #{_pallas_gather_padded.1} parent=1 // pred_fallthru
      _
    // Predicated region
    $region14: #{_pallas_gather_padded.1} parent=1 // pred_check
      _
    $region15: #{_pallas_gather_padded.1} parent=1 // pred_check_branch
      %538 = sbr.rel (0) target = $region17
    $region16: #{_pallas_gather_padded.1} parent=1 // pred_region
      %539 = dma.done [#allocation6], 1024
    $region17: #{_pallas_gather_padded.1} parent=1 // pred_fallthru
      _
    %540 = vsyncpa [#allocation5], 1
    %541 = vsyncpa [#allocation6], 1

</llo_original>
